<compile_context>
chip_gen: v7x
topology: tpu7x:2x2x1
jax: 0.10.0
libtpu: 0.0.40
codegen_flags: <defaults>
</compile_context>

<pallas_src>
import functools

import jax
import jax.numpy as jnp
from jax.experimental import pallas as pl
from jax.experimental.pallas import tpu as pltpu


def _round_up(x, m):
    return ((x + m - 1) // m) * m


# ----------------------------- Pallas kernel -------------------------------- #
def conv_bn_relu_kernel(g_ref, w_ref, bias_ref, o_ref, acc_ref):
    # g_ref:    (TN, TK)    bf16 gathered neighbor features (point tile, K*Cin chunk)
    # w_ref:    (TK, Cpad)  bf16 conv weights with BN scale folded in
    # bias_ref: (1, Cpad)   f32 folded BN bias (beta - mean * scale)
    # o_ref:    (TN, Cpad)  f32 output tile
    # acc_ref:  (TN, Cpad)  f32 VMEM accumulator (persists across the K axis)
    @pl.when(pl.program_id(1) == 0)
    def _init():
        acc_ref[...] = jnp.zeros_like(acc_ref)

    acc_ref[...] += jnp.dot(g_ref[...], w_ref[...],
                            preferred_element_type=jnp.float32)

    @pl.when(pl.program_id(1) == pl.num_programs(1) - 1)
    def _finalize():
        y = acc_ref[...] + bias_ref[...]
        o_ref[...] = jnp.maximum(y, 0.0).astype(o_ref.dtype)


def sparse_conv_bn_relu_pallas(g_flat, w_flat, bias, *, tn, tk):
    """g_flat: [Npad, KCpad] bf16, w_flat: [KCpad, Cpad] bf16, bias: [1, Cpad] f32."""
    npad, kcpad = g_flat.shape
    cpad = w_flat.shape[1]
    assert npad % tn == 0 and kcpad % tk == 0
    grid = (npad // tn, kcpad // tk)
    return pl.pallas_call(
        conv_bn_relu_kernel,
        out_shape=jax.ShapeDtypeStruct((npad, cpad), jnp.float32),
        grid_spec=pltpu.PrefetchScalarGridSpec(
            num_scalar_prefetch=0,
            grid=grid,
            in_specs=[
                pl.BlockSpec((tn, tk), lambda i, j: (i, j)),
                pl.BlockSpec((tk, cpad), lambda i, j: (j, 0)),
                pl.BlockSpec((1, cpad), lambda i, j: (0, 0)),
            ],
            out_specs=pl.BlockSpec((tn, cpad), lambda i, j: (i, 0)),
            scratch_shapes=[pltpu.VMEM((tn, cpad), jnp.float32)],
        ),
        compiler_params=pltpu.CompilerParams(
            dimension_semantics=("parallel", "arbitrary"),
            vmem_limit_bytes=64 * 1024 * 1024,
        ),
    )(g_flat, w_flat, bias)


# ------------------------------- glue (JAX) --------------------------------- #
def kernel_offsets(ks, dilation):
    r = ks // 2
    offs = []
    for dx in range(-r, r + 1):
        for dy in range(-r, r + 1):
            for dz in range(-r, r + 1):
                offs.append((dx * dilation, dy * dilation, dz * dilation))
    return jnp.array(offs, dtype=jnp.int32)  # [K, 3]


def build_kernel_map(coords, offsets):
    """Neighbor index per (offset, point); N means 'missing' (points at zero row).

    O(K * N log N) via linearized coordinate keys + sorted search, instead of the
    previous O(K * N^2) all-pairs compare.
    coords: [N, 3] int32 (unique), offsets: [K, 3] int32 -> [K, N] int32
    """
    n = coords.shape[0]
    reach = jnp.max(jnp.abs(offsets))
    mins = coords.min(axis=0) - reach
    span = (coords.max(axis=0) - coords.min(axis=0)).max()
    base = span + 2 * reach + 1

    def key_of(c):
        cc = c - mins[None, :]
        return (cc[:, 0] * base + cc[:, 1]) * base + cc[:, 2]

    keys = key_of(coords)
    order = jnp.argsort(keys)
    sorted_keys = keys[order]

    def per_offset(off):
        tgt = key_of(coords + off[None, :])
        pos = jnp.searchsorted(sorted_keys, tgt)
        pos_c = jnp.clip(pos, 0, n - 1)
        found = sorted_keys[pos_c] == tgt
        return jnp.where(found, order[pos_c], n).astype(jnp.int32)

    return jax.vmap(per_offset)(offsets)  # [K, N]


def gather_features(feats, nbr_idx):
    """feats: [N, Cin], nbr_idx: [K, N] (N == missing) -> [N, K*Cin]."""
    n, cin = feats.shape
    k = nbr_idx.shape[0]
    feats_ext = jnp.concatenate([feats, jnp.zeros((1, cin), feats.dtype)], axis=0)
    g = jnp.take(feats_ext, nbr_idx.reshape(-1), axis=0)        # [K*N, Cin]
    g = g.reshape(k, n, cin).transpose(1, 0, 2).reshape(n, k * cin)
    return g


def basic_convolution_block(coords, feats, weight, gamma, beta,
                            running_mean, running_var, *,
                            ks=3, dilation=1, eps=1e-5, tn=256, tk_max=512):
    """Forward of BasicConvolutionBlock (stride=1)."""
    n, cin = feats.shape
    k, _, cout = weight.shape
    assert k == ks ** 3

    offs = kernel_offsets(ks, dilation)
    nbr_idx = build_kernel_map(coords, offs)                  # [K, N]
    g_flat = gather_features(feats, nbr_idx)                  # [N, K*Cin]

    # Fold BatchNorm (inference form): scale into weight columns, bias separate.
    scale = gamma / jnp.sqrt(running_var + eps)               # [Cout]
    bias = beta - running_mean * scale                        # [Cout]
    w_flat = weight.reshape(k * cin, cout) * scale[None, :]   # [K*Cin, Cout]

    # Pad to TPU-friendly shapes; choose the K*Cin chunk size tk.
    kc = k * cin
    kcpad = _round_up(kc, 128)
    if kcpad > tk_max:
        tk = tk_max
        kcpad = _round_up(kc, tk)
    else:
        tk = kcpad
    cpad = _round_up(cout, 128)
    npad = _round_up(n, tn)

    # bf16 inputs/weights, f32 accumulation inside the kernel.
    g_p = jnp.zeros((npad, kcpad), jnp.bfloat16).at[:n, :kc].set(
        g_flat.astype(jnp.bfloat16))
    w_p = jnp.zeros((kcpad, cpad), jnp.bfloat16).at[:kc, :cout].set(
        w_flat.astype(jnp.bfloat16))
    b_p = jnp.zeros((1, cpad), jnp.float32).at[0, :cout].set(bias)

    out = sparse_conv_bn_relu_pallas(g_p, w_p, b_p, tn=tn, tk=tk)
    return out[:n, :cout]


# --------------------------------- main -------------------------------------- #
if __name__ == "__main__":
    key = jax.random.PRNGKey(0)
    k_coord, k_feat, k_w, k_g, k_b, k_m, k_v = jax.random.split(key, 7)

    # Small sparse voxel cloud: N unique coords inside an 8^3 grid.
    N, Cin, Cout, KS = 100, 4, 8, 3
    K = KS ** 3
    S = 8
    all_idx = jax.random.permutation(k_coord, S * S * S)[:N]
    coords = jnp.stack(
        [all_idx // (S * S), (all_idx // S) % S, all_idx % S], axis=-1
    ).astype(jnp.int32)                                              # [N, 3]

    feats = jax.random.normal(k_feat, (N, Cin), jnp.float32)         # [N, Cin]

    # Deterministic parameter init (synthetic, not a checkpoint).
    weight = 0.1 * jax.random.normal(k_w, (K, Cin, Cout), jnp.float32)
    gamma = 1.0 + 0.1 * jax.random.normal(k_g, (Cout,), jnp.float32)
    beta = 0.1 * jax.random.normal(k_b, (Cout,), jnp.float32)
    running_mean = 0.1 * jax.random.normal(k_m, (Cout,), jnp.float32)
    running_var = jnp.abs(1.0 + 0.1 * jax.random.normal(k_v, (Cout,), jnp.float32))

    fwd = jax.jit(functools.partial(
        basic_convolution_block, ks=KS, dilation=1, eps=1e-5, tn=256, tk_max=512))
    out = fwd(coords, feats, weight, gamma, beta, running_mean, running_var)
    out = jax.block_until_ready(out)

    # Pure-JAX reference (uses the same bf16 input/weight rounding, f32 math).
    offs = kernel_offsets(KS, 1)
    nbr_idx = build_kernel_map(coords, offs)
    g_flat = gather_features(feats, nbr_idx)
    scale = gamma / jnp.sqrt(running_var + 1e-5)
    bias = beta - running_mean * scale
    g_bf = g_flat.astype(jnp.bfloat16).astype(jnp.float32)
    w_bf = (weight.reshape(K * Cin, Cout) * scale[None, :]
            ).astype(jnp.bfloat16).astype(jnp.float32)
    ref = jnp.maximum(g_bf @ w_bf + bias, 0.0)

    assert out.shape == (N, Cout)
    assert jnp.allclose(out, ref, atol=5e-3, rtol=5e-3), (
        float(jnp.max(jnp.abs(out - ref))))
    print("KERNEL_OK")
</pallas_src>

<mosaic_0001>
module attributes {stable_mosaic.version = 11 : i64} {
  func.func @conv_bn_relu_kernel(%arg0: i32, %arg1: i32, %arg2: memref<256x128xbf16, #tpu.memory_space<vmem>>, %arg3: memref<128x128xbf16, #tpu.memory_space<vmem>>, %arg4: memref<1x128xf32, #tpu.memory_space<vmem>>, %arg5: memref<256x128xf32, #tpu.memory_space<vmem>>, %arg6: memref<256x128xf32, #tpu.memory_space<vmem>>) attributes {dimension_semantics = [#tpu.dimension_semantics<parallel>, #tpu.dimension_semantics<arbitrary>], iteration_bounds = array<i64: 1, 1>, scalar_prefetch = 0 : i64, scratch_operands = 1 : i64, tpu.core_type = #tpu.core_type<tc>, window_params = [{transform_indices = @transform_0, window_bounds = array<i64: 256, 128>}, {transform_indices = @transform_1, window_bounds = array<i64: 128, 128>}, {pipeline_mode = #tpu.pipeline_mode<synchronous>, transform_indices = @transform_2, window_bounds = array<i64: 1, 128>}, {transform_indices = @transform_3, window_bounds = array<i64: 256, 128>}]} {
    %c0_i32 = arith.constant 0 : i32
    %0 = arith.cmpi eq, %arg1, %c0_i32 : i32
    %1 = arith.extui %0 : i1 to i32
    %c0_i32_0 = arith.constant 0 : i32
    %2 = arith.cmpi ne, %1, %c0_i32_0 : i32
    scf.if %2 {
      %cst_10 = arith.constant 0.000000e+00 : f32
      %12 = vector.broadcast %cst_10 : f32 to vector<256x128xf32>
      %c0_11 = arith.constant 0 : index
      %c0_12 = arith.constant 0 : index
      %13 = vector.load %arg6[%c0_11, %c0_12] : memref<256x128xf32, #tpu.memory_space<vmem>>, vector<256x128xf32>
      tpu.vector_store %arg6[%c0_11, %c0_12], %12 {strides = array<i32>} : memref<256x128xf32, #tpu.memory_space<vmem>>, vector<256x128xf32>,
    } else {
    }
    %c0 = arith.constant 0 : index
    %c0_1 = arith.constant 0 : index
    %3 = vector.load %arg6[%c0, %c0_1] : memref<256x128xf32, #tpu.memory_space<vmem>>, vector<256x128xf32>
    %c0_2 = arith.constant 0 : index
    %c0_3 = arith.constant 0 : index
    %4 = vector.load %arg2[%c0_2, %c0_3] : memref<256x128xbf16, #tpu.memory_space<vmem>>, vector<256x128xbf16>
    %c0_4 = arith.constant 0 : index
    %c0_5 = arith.constant 0 : index
    %5 = vector.load %arg3[%c0_4, %c0_5] : memref<128x128xbf16, #tpu.memory_space<vmem>>, vector<128x128xbf16>
    %cst = arith.constant dense<0.000000e+00> : vector<256x128xf32>
    %6 = tpu.matmul %4, %5, %cst {dimension_numbers = #tpu.dot_dimension_numbers<[1], [0], [0], [1], [0, 0, 1, 1], [], []>} : vector<256x128xbf16>, vector<128x128xbf16>, vector<256x128xf32> -> vector<256x128xf32>
    %7 = arith.addf %3, %6 : vector<256x128xf32>
    %c0_6 = arith.constant 0 : index
    %c0_7 = arith.constant 0 : index
    %8 = vector.load %arg6[%c0_6, %c0_7] : memref<256x128xf32, #tpu.memory_space<vmem>>, vector<256x128xf32>
    tpu.vector_store %arg6[%c0_6, %c0_7], %7 {strides = array<i32>} : memref<256x128xf32, #tpu.memory_space<vmem>>, vector<256x128xf32>,
    %c0_i32_8 = arith.constant 0 : i32
    %9 = arith.cmpi eq, %arg1, %c0_i32_8 : i32
    %10 = arith.extui %9 : i1 to i32
    %c0_i32_9 = arith.constant 0 : i32
    %11 = arith.cmpi ne, %10, %c0_i32_9 : i32
    scf.if %11 {
      %c0_10 = arith.constant 0 : index
      %c0_11 = arith.constant 0 : index
      %12 = vector.load %arg6[%c0_10, %c0_11] : memref<256x128xf32, #tpu.memory_space<vmem>>, vector<256x128xf32>
      %c0_12 = arith.constant 0 : index
      %c0_13 = arith.constant 0 : index
      %13 = vector.load %arg4[%c0_12, %c0_13] : memref<1x128xf32, #tpu.memory_space<vmem>>, vector<1x128xf32>
      %14 = vector.broadcast %13 : vector<1x128xf32> to vector<256x128xf32>
      %15 = arith.addf %12, %14 : vector<256x128xf32>
      %cst_14 = arith.constant 0.000000e+00 : f32
      %16 = vector.broadcast %cst_14 : f32 to vector<256x128xf32>
      %17 = arith.maximumf %15, %16 : vector<256x128xf32>
      %c0_15 = arith.constant 0 : index
      %c0_16 = arith.constant 0 : index
      %18 = vector.load %arg5[%c0_15, %c0_16] : memref<256x128xf32, #tpu.memory_space<vmem>>, vector<256x128xf32>
      tpu.vector_store %arg5[%c0_15, %c0_16], %17 {strides = array<i32>} : memref<256x128xf32, #tpu.memory_space<vmem>>, vector<256x128xf32>,
    } else {
    }
    return
  }
  func.func @transform_0(%arg0: i32, %arg1: i32) -> (i32, i32) {
    %c0_i32 = arith.constant 0 : i32
    return %arg0, %arg1 : i32, i32
  }
  func.func @transform_1(%arg0: i32, %arg1: i32) -> (i32, i32) {
    %c0_i32 = arith.constant 0 : i32
    %c0_i32_0 = arith.constant 0 : i32
    return %arg1, %c0_i32 : i32, i32
  }
  func.func @transform_2(%arg0: i32, %arg1: i32) -> (i32, i32) {
    %c0_i32 = arith.constant 0 : i32
    %c0_i32_0 = arith.constant 0 : i32
    %c0_i32_1 = arith.constant 0 : i32
    return %c0_i32, %c0_i32_0 : i32, i32
  }
  func.func @transform_3(%arg0: i32, %arg1: i32) -> (i32, i32) {
    %c0_i32 = arith.constant 0 : i32
    %c0_i32_0 = arith.constant 0 : i32
    return %arg0, %c0_i32 : i32, i32
  }
}

</mosaic_0001>

<llo_original>
// kernel: custom-call.1
$region0: #{custom-call.1}
  %s0 = inlined_call_operand.vmem [shape: u32[27,100], index: 0, kind: output, shape index: {}]

// kernel: squeeze.6
$region0: #{squeeze.6}
  %s0 = inlined_call_operand.vmem [shape: s32[2700], index: 0, kind: input, shape index: {}]
  %s1 = inlined_call_operand.vmem [shape: s32[27,100], index: 1, kind: output, shape index: {}]
  %v2 = vld [vmem:[%s0] sm:$0x1]
  %vm3 = vcmask 818176
  %4 = vst.msk [vmem:[%s1] sm:$0x1] %vm3, %v2
  %s5 = scalar_lea.vmem %s0, 7
  %v6 = vld [vmem:[%s5] sm:$0x1]
  %7 = vrot.lane.b32.xlu0 %v6, 124
  %v8 = vpop.permute.xlu0 %7
  %vm9 = vcmask 818176
  %s10 = scalar_lea.vmem %s1, 9
  %11 = vst.msk [vmem:[%s10] sm:$0x1] %vm9, %v8
  %s12 = scalar_lea.vmem %s0, 14
  %v13 = vld [vmem:[%s12] sm:$0x1]
  %14 = vrot.lane.b32.xlu0 %v13, 120
  %v15 = vpop.permute.xlu0 %14
  %vm16 = vcmask 818176
  %s17 = scalar_lea.vmem %s1, 18
  %18 = vst.msk [vmem:[%s17] sm:$0x1] %vm16, %v15
  %s19 = scalar_lea.vmem %s0, 3
  %v20 = vld [vmem:[%s19] sm:$0x1]
  %21 = vrot.lane.b32.xlu0 %v20, 112
  %v22 = vpop.permute.xlu0 %21
  %vm23 = vcmask 818176
  %s24 = scalar_lea.vmem %s1, 4
  %25 = vst.msk [vmem:[%s24] sm:$0x1] %vm23, %v22
  %s26 = scalar_lea.vmem %s0, 10
  %v27 = vld [vmem:[%s26] sm:$0x1]
  %28 = vrot.lane.b32.xlu0 %v27, 108
  %v29 = vpop.permute.xlu0 %28
  %vm30 = vcmask 818176
  %s31 = scalar_lea.vmem %s1, 13
  %32 = vst.msk [vmem:[%s31] sm:$0x1] %vm30, %v29
  %s33 = scalar_lea.vmem %s0, 17
  %v34 = vld [vmem:[%s33] sm:$0x1]
  %35 = vrot.lane.b32.xlu0 %v34, 104
  %v36 = vpop.permute.xlu0 %35
  %vm37 = vcmask 818176
  %s38 = scalar_lea.vmem %s1, 22
  %39 = vst.msk [vmem:[%s38] sm:$0x1] %vm37, %v36
  %s40 = scalar_lea.vmem %s0, 6
  %v41 = vld [vmem:[%s40] sm:$0x1]
  %s42 = scalar_lea.vmem %s0, 7
  %v43 = vld [vmem:[%s42] sm:$0x1]
  %vm44 = vcmask 261120
  %v45 = vsel %vm44, %v43, %v41
  %46 = vrot.lane.b32.xlu0 %v45, 96
  %v47 = vpop.permute.xlu0 %46
  %vm48 = vcmask 785408
  %s49 = scalar_lea.vmem %s1, 8
  %50 = vst.msk [vmem:[%s49] sm:$0x1] %vm48, %v47
  %vm51 = vcmask 818944
  %s52 = scalar_lea.vmem %s1, 8
  %53 = vst.msk [vmem:[%s52] sm:$0x1] %vm51, %v47
  %s54 = scalar_lea.vmem %s0, 13
  %v55 = vld [vmem:[%s54] sm:$0x1]
  %s56 = scalar_lea.vmem %s0, 14
  %v57 = vld [vmem:[%s56] sm:$0x1]
  %vm58 = vcmask 293888
  %v59 = vsel %vm58, %v57, %v55
  %60 = vrot.lane.b32.xlu0 %v59, 92
  %v61 = vpop.permute.xlu0 %60
  %vm62 = vcmask 752640
  %s63 = scalar_lea.vmem %s1, 17
  %64 = vst.msk [vmem:[%s63] sm:$0x1] %vm62, %v61
  %vm65 = vcmask 818912
  %s66 = scalar_lea.vmem %s1, 17
  %67 = vst.msk [vmem:[%s66] sm:$0x1] %vm65, %v61
  %s68 = scalar_lea.vmem %s0, 20
  %v69 = vld [vmem:[%s68] sm:$0x1]
  %s70 = scalar_lea.vmem %s0, 21
  %v71 = vld [vmem:[%s70] sm:$0x1]
  %vm72 = vcmask 326656
  %v73 = vsel %vm72, %v71, %v69
  %74 = vrot.lane.b32.xlu0 %v73, 88
  %v75 = vpop.permute.xlu0 %74
  %vm76 = vcmask 719872
  %s77 = scalar_lea.vmem %s1, 26
  %78 = vst.msk [vmem:[%s77] sm:$0x1] %vm76, %v75
  %vm79 = vcmask 818880
  %s80 = scalar_lea.vmem %s1, 26
  %81 = vst.msk [vmem:[%s80] sm:$0x1] %vm79, %v75
  %s82 = scalar_lea.vmem %s0, 2
  %v83 = vld [vmem:[%s82] sm:$0x1]
  %s84 = scalar_lea.vmem %s0, 3
  %v85 = vld [vmem:[%s84] sm:$0x1]
  %vm86 = vcmask 359424
  %v87 = vsel %vm86, %v85, %v83
  %88 = vrot.lane.b32.xlu0 %v87, 84
  %v89 = vpop.permute.xlu0 %88
  %vm90 = vcmask 687104
  %s91 = scalar_lea.vmem %s1, 3
  %92 = vst.msk [vmem:[%s91] sm:$0x1] %vm90, %v89
  %vm93 = vcmask 818848
  %s94 = scalar_lea.vmem %s1, 3
  %95 = vst.msk [vmem:[%s94] sm:$0x1] %vm93, %v89
  %s96 = scalar_lea.vmem %s0, 9
  %v97 = vld [vmem:[%s96] sm:$0x1]
  %s98 = scalar_lea.vmem %s0, 10
  %v99 = vld [vmem:[%s98] sm:$0x1]
  %vm100 = vcmask 392192
  %v101 = vsel %vm100, %v99, %v97
  %102 = vrot.lane.b32.xlu0 %v101, 80
  %v103 = vpop.permute.xlu0 %102
  %vm104 = vcmask 654336
  %s105 = scalar_lea.vmem %s1, 12
  %106 = vst.msk [vmem:[%s105] sm:$0x1] %vm104, %v103
  %vm107 = vcmask 818816
  %s108 = scalar_lea.vmem %s1, 12
  %109 = vst.msk [vmem:[%s108] sm:$0x1] %vm107, %v103
  %s110 = scalar_lea.vmem %s0, 16
  %v111 = vld [vmem:[%s110] sm:$0x1]
  %s112 = scalar_lea.vmem %s0, 17
  %v113 = vld [vmem:[%s112] sm:$0x1]
  %vm114 = vcmask 424960
  %v115 = vsel %vm114, %v113, %v111
  %116 = vrot.lane.b32.xlu0 %v115, 76
  %v117 = vpop.permute.xlu0 %116
  %vm118 = vcmask 621568
  %s119 = scalar_lea.vmem %s1, 21
  %120 = vst.msk [vmem:[%s119] sm:$0x1] %vm118, %v117
  %vm121 = vcmask 818784
  %s122 = scalar_lea.vmem %s1, 21
  %123 = vst.msk [vmem:[%s122] sm:$0x1] %vm121, %v117
  %s124 = scalar_lea.vmem %s0, 5
  %v125 = vld [vmem:[%s124] sm:$0x1]
  %s126 = scalar_lea.vmem %s0, 6
  %v127 = vld [vmem:[%s126] sm:$0x1]
  %vm128 = vcmask 490496
  %v129 = vsel %vm128, %v127, %v125
  %130 = vrot.lane.b32.xlu0 %v129, 68
  %v131 = vpop.permute.xlu0 %130
  %vm132 = vcmask 556032
  %s133 = scalar_lea.vmem %s1, 7
  %134 = vst.msk [vmem:[%s133] sm:$0x1] %vm132, %v131
  %vm135 = vcmask 818720
  %s136 = scalar_lea.vmem %s1, 7
  %137 = vst.msk [vmem:[%s136] sm:$0x1] %vm135, %v131
  %s138 = scalar_lea.vmem %s0, 12
  %v139 = vld [vmem:[%s138] sm:$0x1]
  %s140 = scalar_lea.vmem %s0, 13
  %v141 = vld [vmem:[%s140] sm:$0x1]
  %vm142 = vcmask 523264
  %v143 = vsel %vm142, %v141, %v139
  %144 = vrot.lane.b32.xlu0 %v143, 64
  %v145 = vpop.permute.xlu0 %144
  %vm146 = vcmask 523264
  %s147 = scalar_lea.vmem %s1, 16
  %148 = vst.msk [vmem:[%s147] sm:$0x1] %vm146, %v145
  %vm149 = vcmask 818688
  %s150 = scalar_lea.vmem %s1, 16
  %151 = vst.msk [vmem:[%s150] sm:$0x1] %vm149, %v145
  %s152 = scalar_lea.vmem %s0, 19
  %v153 = vld [vmem:[%s152] sm:$0x1]
  %s154 = scalar_lea.vmem %s0, 20
  %v155 = vld [vmem:[%s154] sm:$0x1]
  %vm156 = vcmask 556032
  %v157 = vsel %vm156, %v155, %v153
  %158 = vrot.lane.b32.xlu0 %v157, 60
  %v159 = vpop.permute.xlu0 %158
  %vm160 = vcmask 490496
  %s161 = scalar_lea.vmem %s1, 25
  %162 = vst.msk [vmem:[%s161] sm:$0x1] %vm160, %v159
  %vm163 = vcmask 818656
  %s164 = scalar_lea.vmem %s1, 25
  %165 = vst.msk [vmem:[%s164] sm:$0x1] %vm163, %v159
  %s166 = scalar_lea.vmem %s0, 1
  %v167 = vld [vmem:[%s166] sm:$0x1]
  %s168 = scalar_lea.vmem %s0, 2
  %v169 = vld [vmem:[%s168] sm:$0x1]
  %vm170 = vcmask 588800
  %v171 = vsel %vm170, %v169, %v167
  %172 = vrot.lane.b32.xlu0 %v171, 56
  %v173 = vpop.permute.xlu0 %172
  %vm174 = vcmask 457728
  %s175 = scalar_lea.vmem %s1, 2
  %176 = vst.msk [vmem:[%s175] sm:$0x1] %vm174, %v173
  %vm177 = vcmask 818624
  %s178 = scalar_lea.vmem %s1, 2
  %179 = vst.msk [vmem:[%s178] sm:$0x1] %vm177, %v173
  %s180 = scalar_lea.vmem %s0, 8
  %v181 = vld [vmem:[%s180] sm:$0x1]
  %s182 = scalar_lea.vmem %s0, 9
  %v183 = vld [vmem:[%s182] sm:$0x1]
  %vm184 = vcmask 621568
  %v185 = vsel %vm184, %v183, %v181
  %186 = vrot.lane.b32.xlu0 %v185, 52
  %v187 = vpop.permute.xlu0 %186
  %vm188 = vcmask 424960
  %s189 = scalar_lea.vmem %s1, 11
  %190 = vst.msk [vmem:[%s189] sm:$0x1] %vm188, %v187
  %vm191 = vcmask 818592
  %s192 = scalar_lea.vmem %s1, 11
  %193 = vst.msk [vmem:[%s192] sm:$0x1] %vm191, %v187
  %s194 = scalar_lea.vmem %s0, 15
  %v195 = vld [vmem:[%s194] sm:$0x1]
  %s196 = scalar_lea.vmem %s0, 16
  %v197 = vld [vmem:[%s196] sm:$0x1]
  %vm198 = vcmask 654336
  %v199 = vsel %vm198, %v197, %v195
  %200 = vrot.lane.b32.xlu0 %v199, 48
  %v201 = vpop.permute.xlu0 %200
  %vm202 = vcmask 392192
  %s203 = scalar_lea.vmem %s1, 20
  %204 = vst.msk [vmem:[%s203] sm:$0x1] %vm202, %v201
  %vm205 = vcmask 818560
  %s206 = scalar_lea.vmem %s1, 20
  %207 = vst.msk [vmem:[%s206] sm:$0x1] %vm205, %v201
  %s208 = scalar_lea.vmem %s0, 4
  %v209 = vld [vmem:[%s208] sm:$0x1]
  %s210 = scalar_lea.vmem %s0, 5
  %v211 = vld [vmem:[%s210] sm:$0x1]
  %vm212 = vcmask 719872
  %v213 = vsel %vm212, %v211, %v209
  %214 = vrot.lane.b32.xlu0 %v213, 40
  %v215 = vpop.permute.xlu0 %214
  %vm216 = vcmask 326656
  %s217 = scalar_lea.vmem %s1, 6
  %218 = vst.msk [vmem:[%s217] sm:$0x1] %vm216, %v215
  %vm219 = vcmask 818496
  %s220 = scalar_lea.vmem %s1, 6
  %221 = vst.msk [vmem:[%s220] sm:$0x1] %vm219, %v215
  %s222 = scalar_lea.vmem %s0, 11
  %v223 = vld [vmem:[%s222] sm:$0x1]
  %s224 = scalar_lea.vmem %s0, 12
  %v225 = vld [vmem:[%s224] sm:$0x1]
  %vm226 = vcmask 752640
  %v227 = vsel %vm226, %v225, %v223
  %228 = vrot.lane.b32.xlu0 %v227, 36
  %v229 = vpop.permute.xlu0 %228
  %vm230 = vcmask 293888
  %s231 = scalar_lea.vmem %s1, 15
  %232 = vst.msk [vmem:[%s231] sm:$0x1] %vm230, %v229
  %vm233 = vcmask 818464
  %s234 = scalar_lea.vmem %s1, 15
  %235 = vst.msk [vmem:[%s234] sm:$0x1] %vm233, %v229
  %s236 = scalar_lea.vmem %s0, 18
  %v237 = vld [vmem:[%s236] sm:$0x1]
  %s238 = scalar_lea.vmem %s0, 19
  %v239 = vld [vmem:[%s238] sm:$0x1]
  %vm240 = vcmask 785408
  %v241 = vsel %vm240, %v239, %v237
  %242 = vrot.lane.b32.xlu0 %v241, 32
  %v243 = vpop.permute.xlu0 %242
  %vm244 = vcmask 261120
  %s245 = scalar_lea.vmem %s1, 24
  %246 = vst.msk [vmem:[%s245] sm:$0x1] %vm244, %v243
  %vm247 = vcmask 818432
  %s248 = scalar_lea.vmem %s1, 24
  %249 = vst.msk [vmem:[%s248] sm:$0x1] %vm247, %v243
  %v250 = vld [vmem:[%s0] sm:$0x1]
  %s251 = scalar_lea.vmem %s0, 1
  %v252 = vld [vmem:[%s251] sm:$0x1]
  %vm253 = vcmask 818176
  %v254 = vsel %vm253, %v252, %v250
  %255 = vrot.lane.b32.xlu0 %v254, 28
  %v256 = vpop.permute.xlu0 %255
  %vm257 = vcmask 228352
  %s258 = scalar_lea.vmem %s1, 1
  %259 = vst.msk [vmem:[%s258] sm:$0x1] %vm257, %v256
  %vm260 = vcmask 818400
  %s261 = scalar_lea.vmem %s1, 1
  %262 = vst.msk [vmem:[%s261] sm:$0x1] %vm260, %v256
  %s263 = scalar_lea.vmem %s0, 7
  %v264 = vld [vmem:[%s263] sm:$0x1]
  %s265 = scalar_lea.vmem %s0, 8
  %v266 = vld [vmem:[%s265] sm:$0x1]
  %vm267 = vcmask 850944
  %v268 = vsel %vm267, %v266, %v264
  %269 = vrot.lane.b32.xlu0 %v268, 24
  %v270 = vpop.permute.xlu0 %269
  %vm271 = vcmask 195584
  %s272 = scalar_lea.vmem %s1, 10
  %273 = vst.msk [vmem:[%s272] sm:$0x1] %vm271, %v270
  %vm274 = vcmask 818368
  %s275 = scalar_lea.vmem %s1, 10
  %276 = vst.msk [vmem:[%s275] sm:$0x1] %vm274, %v270
  %s277 = scalar_lea.vmem %s0, 14
  %v278 = vld [vmem:[%s277] sm:$0x1]
  %s279 = scalar_lea.vmem %s0, 15
  %v280 = vld [vmem:[%s279] sm:$0x1]
  %vm281 = vcmask 883712
  %v282 = vsel %vm281, %v280, %v278
  %283 = vrot.lane.b32.xlu0 %v282, 20
  %v284 = vpop.permute.xlu0 %283
  %vm285 = vcmask 162816
  %s286 = scalar_lea.vmem %s1, 19
  %287 = vst.msk [vmem:[%s286] sm:$0x1] %vm285, %v284
  %vm288 = vcmask 818336
  %s289 = scalar_lea.vmem %s1, 19
  %290 = vst.msk [vmem:[%s289] sm:$0x1] %vm288, %v284
  %s291 = scalar_lea.vmem %s0, 3
  %v292 = vld [vmem:[%s291] sm:$0x1]
  %s293 = scalar_lea.vmem %s0, 4
  %v294 = vld [vmem:[%s293] sm:$0x1]
  %vm295 = vcmask 949248
  %v296 = vsel %vm295, %v294, %v292
  %297 = vrot.lane.b32.xlu0 %v296, 12
  %v298 = vpop.permute.xlu0 %297
  %vm299 = vcmask 97280
  %s300 = scalar_lea.vmem %s1, 5
  %301 = vst.msk [vmem:[%s300] sm:$0x1] %vm299, %v298
  %vm302 = vcmask 818272
  %s303 = scalar_lea.vmem %s1, 5
  %304 = vst.msk [vmem:[%s303] sm:$0x1] %vm302, %v298
  %s305 = scalar_lea.vmem %s0, 10
  %v306 = vld [vmem:[%s305] sm:$0x1]
  %s307 = scalar_lea.vmem %s0, 11
  %v308 = vld [vmem:[%s307] sm:$0x1]
  %vm309 = vcmask 982016
  %v310 = vsel %vm309, %v308, %v306
  %311 = vrot.lane.b32.xlu0 %v310, 8
  %v312 = vpop.permute.xlu0 %311
  %vm313 = vcmask 64512
  %s314 = scalar_lea.vmem %s1, 14
  %315 = vst.msk [vmem:[%s314] sm:$0x1] %vm313, %v312
  %vm316 = vcmask 818240
  %s317 = scalar_lea.vmem %s1, 14
  %318 = vst.msk [vmem:[%s317] sm:$0x1] %vm316, %v312
  %s319 = scalar_lea.vmem %s0, 17
  %v320 = vld [vmem:[%s319] sm:$0x1]
  %s321 = scalar_lea.vmem %s0, 18
  %v322 = vld [vmem:[%s321] sm:$0x1]
  %vm323 = vcmask 1014784
  %v324 = vsel %vm323, %v322, %v320
  %325 = vrot.lane.b32.xlu0 %v324, 4
  %v326 = vpop.permute.xlu0 %325
  %vm327 = vcmask 31744
  %s328 = scalar_lea.vmem %s1, 23
  %329 = vst.msk [vmem:[%s328] sm:$0x1] %vm327, %v326
  %vm330 = vcmask 818208
  %s331 = scalar_lea.vmem %s1, 23
  %332 = vst.msk [vmem:[%s331] sm:$0x1] %vm330, %v326

// kernel: basic_convolution_block.1
$region0: #{basic_convolution_block.1}
  #allocation0 [shape = 'u32[]', space=smem, size = 0x4, offset = 0x4, fixed_abs, tag = 'smem constant byte address 0x4 - core index']
  #allocation1 [shape = 'u32[144,128]{1,0:T(1,128)}', space=vmem, size = 0x12000, scoped, tag = 'internal scratch']
  #allocation2 [shape = 'f32[256,128]{1,0:T(8,128)}', space=vmem, size = 0x20000, scoped, tag = 'scratch operand']
  %s0 = inlined_call_operand.hbm [shape: bf16[256,128], index: 0, kind: input, shape index: {}]
  %s1 = inlined_call_operand.hbm [shape: bf16[128,128], index: 1, kind: input, shape index: {}]
  %s2 = inlined_call_operand.hbm [shape: f32[1,128], index: 2, kind: input, shape index: {}]
  %s3 = inlined_call_operand.hbm [shape: f32[256,128], index: 3, kind: output, shape index: {}]
  %s4 = sld [smem:[#allocation0]]
  $region42: #{basic_convolution_block.1} parent=0
    _
  %s6 = ssub.s32 1, %s4
  %s7 = scalar_select 0, %s6, %s4
  $region1: #{basic_convolution_block.1} parent=0
    #allocation3 [shape = 'u8[65536]{0}', space=vmem, size = 0x10000, scoped, tag = 'input window, operand 0, single buffered']
    #allocation4 [shape = 's32[1]{0}', space=sflag, size = 0x4, scoped, tag = 'scoped memory for basic_convolution_block.1']
    #allocation5 [shape = 's32[1]{0}', space=sflag, size = 0x4, scoped, tag = 'scoped memory for basic_convolution_block.1']
    #allocation6 [shape = 'u8[32768]{0}', space=vmem, size = 0x8000, scoped, tag = 'input window, operand 1, single buffered']
    #allocation7 [shape = 's32[1]{0}', space=sflag, size = 0x4, scoped, tag = 'scoped memory for basic_convolution_block.1']
    #allocation8 [shape = 'u8[512]{0}', space=vmem, size = 0x400, scoped, tag = 'input window, operand 2, single buffered']
    #allocation9 [shape = 'u8[131072]{0}', space=vmem, size = 0x20000, scoped, tag = 'output window, operand 0, single buffered']
    %8 = vsyncpa [#allocation4], 0
    %9 = vsyncpa [#allocation7], 0
    %10 = vsyncpa [#allocation5], 0
    // Predicated region
    $region2: #{basic_convolution_block.1} parent=1 // pred_check
      _
    $region3: #{basic_convolution_block.1} parent=1 // pred_check_branch
      %12 = sbr.rel (0) target = $region5
    $region4: #{basic_convolution_block.1} parent=1 // pred_region
      %s14 = ssub.s32 2048, 2048
      %15 = vsyncadd [#allocation4], %s14
      %s16 = sshll.u32 [#allocation3], 4
      %s17 = int_to_ptr.vmem [resolvable:$true] %s16
      %22 = dma.hbm_to_vmem [thread:$0]  %s0, 2048, %s17, [#allocation4], 64, 64, 4
    $region5: #{basic_convolution_block.1} parent=1 // pred_fallthru
      _
    // Predicated region
    $region6: #{basic_convolution_block.1} parent=1 // pred_check
      _
    $region7: #{basic_convolution_block.1} parent=1 // pred_check_branch
      %24 = sbr.rel (0) target = $region9
    $region8: #{basic_convolution_block.1} parent=1 // pred_region
      %s26 = ssub.s32 1024, 1024
      %27 = vsyncadd [#allocation7], %s26
      %s28 = sshll.u32 [#allocation6], 4
      %s29 = int_to_ptr.vmem [resolvable:$true] %s28
      %34 = dma.hbm_to_vmem [thread:$0]  %s1, 1024, %s29, [#allocation7], 64, 64, 4
    $region9: #{basic_convolution_block.1} parent=1 // pred_fallthru
      _
    // Predicated region
    $region10: #{basic_convolution_block.1} parent=1 // pred_check
      _
    $region11: #{basic_convolution_block.1} parent=1 // pred_check_branch
      %36 = sbr.rel (0) target = $region13
    $region12: #{basic_convolution_block.1} parent=1 // pred_region
      %s38 = ssub.s32 16, 16
      %39 = vsyncadd [#allocation7], %s38
      %s41 = sshll.u32 [#allocation8], 4
      %s42 = int_to_ptr.vmem [resolvable:$true] %s41
      %44 = dma.hbm_to_vmem [thread:$0]  %s2, 16, %s42, [#allocation7]
    $region13: #{basic_convolution_block.1} parent=1 // pred_fallthru
      _
    // Predicated region
    $region14: #{basic_convolution_block.1} parent=1 // pred_check
      _
    $region15: #{basic_convolution_block.1} parent=1 // pred_check_branch
      %46 = sbr.rel (0) target = $region17
    $region16: #{basic_convolution_block.1} parent=1 // pred_region
      %47 = dma.done [#allocation4], 2048
    $region17: #{basic_convolution_block.1} parent=1 // pred_fallthru
      _
    // Predicated region
    $region18: #{basic_convolution_block.1} parent=1 // pred_check
      _
    $region19: #{basic_convolution_block.1} parent=1 // pred_check_branch
      %49 = sbr.rel (0) target = $region21
    $region20: #{basic_convolution_block.1} parent=1 // pred_region
      %50 = dma.done [#allocation7], 1024
    $region21: #{basic_convolution_block.1} parent=1 // pred_fallthru
      _
    // Predicated region
    $region22: #{basic_convolution_block.1} parent=1 // pred_check
      _
    $region23: #{basic_convolution_block.1} parent=1 // pred_check_branch
      %52 = sbr.rel (0) target = $region25
    $region24: #{basic_convolution_block.1} parent=1 // pred_region
      %53 = dma.done [#allocation7], 16
    $region25: #{basic_convolution_block.1} parent=1 // pred_fallthru
      _
    %p55 = scmp.eq.s32.totalorder 0, 0
    // Predicated region
    $region26: #{basic_convolution_block.1} parent=1 // pred_check
      %p56 = pneg %p55
    $region27: #{basic_convolution_block.1} parent=1 // pred_check_branch
      %58 = sbr.rel (%p56) target = $region29
    $region28: #{basic_convolution_block.1} parent=1 // pred_region
      %59 = vst [vmem:[#allocation2] sm:$0xff] 0.0
      %60 = vst [vmem:[#allocation2 + $0x8] sm:$0xff] 0.0
      %61 = vst [vmem:[#allocation2 + $0x10] sm:$0xff] 0.0
      %62 = vst [vmem:[#allocation2 + $0x18] sm:$0xff] 0.0
      %63 = vst [vmem:[#allocation2 + $0x20] sm:$0xff] 0.0
      %64 = vst [vmem:[#allocation2 + $0x28] sm:$0xff] 0.0
      %65 = vst [vmem:[#allocation2 + $0x30] sm:$0xff] 0.0
      %66 = vst [vmem:[#allocation2 + $0x38] sm:$0xff] 0.0
      %67 = vst [vmem:[#allocation2 + $0x40] sm:$0xff] 0.0
      %68 = vst [vmem:[#allocation2 + $0x48] sm:$0xff] 0.0
      %69 = vst [vmem:[#allocation2 + $0x50] sm:$0xff] 0.0
      %70 = vst [vmem:[#allocation2 + $0x58] sm:$0xff] 0.0
      %71 = vst [vmem:[#allocation2 + $0x60] sm:$0xff] 0.0
      %72 = vst [vmem:[#allocation2 + $0x68] sm:$0xff] 0.0
      %73 = vst [vmem:[#allocation2 + $0x70] sm:$0xff] 0.0
      %74 = vst [vmem:[#allocation2 + $0x78] sm:$0xff] 0.0
      %75 = vst [vmem:[#allocation2 + $0x80] sm:$0xff] 0.0
      %76 = vst [vmem:[#allocation2 + $0x88] sm:$0xff] 0.0
      %77 = vst [vmem:[#allocation2 + $0x90] sm:$0xff] 0.0
      %78 = vst [vmem:[#allocation2 + $0x98] sm:$0xff] 0.0
      %79 = vst [vmem:[#allocation2 + $0xa0] sm:$0xff] 0.0
      %80 = vst [vmem:[#allocation2 + $0xa8] sm:$0xff] 0.0
      %81 = vst [vmem:[#allocation2 + $0xb0] sm:$0xff] 0.0
      %82 = vst [vmem:[#allocation2 + $0xb8] sm:$0xff] 0.0
      %83 = vst [vmem:[#allocation2 + $0xc0] sm:$0xff] 0.0
      %84 = vst [vmem:[#allocation2 + $0xc8] sm:$0xff] 0.0
      %85 = vst [vmem:[#allocation2 + $0xd0] sm:$0xff] 0.0
      %86 = vst [vmem:[#allocation2 + $0xd8] sm:$0xff] 0.0
      %87 = vst [vmem:[#allocation2 + $0xe0] sm:$0xff] 0.0
      %88 = vst [vmem:[#allocation2 + $0xe8] sm:$0xff] 0.0
      %89 = vst [vmem:[#allocation2 + $0xf0] sm:$0xff] 0.0
      %90 = vst [vmem:[#allocation2 + $0xf8] sm:$0xff] 0.0
    $region29: #{basic_convolution_block.1} parent=1 // pred_fallthru
      _
    %v91 = vld [vmem:[#allocation2] sm:$0xff]
    %v92 = vld [vmem:[#allocation2 + $0x8] sm:$0xff]
    %v93 = vld [vmem:[#allocation2 + $0x10] sm:$0xff]
    %v94 = vld [vmem:[#allocation2 + $0x18] sm:$0xff]
    %v95 = vld [vmem:[#allocation2 + $0x20] sm:$0xff]
    %v96 = vld [vmem:[#allocation2 + $0x28] sm:$0xff]
    %v97 = vld [vmem:[#allocation2 + $0x30] sm:$0xff]
    %v98 = vld [vmem:[#allocation2 + $0x38] sm:$0xff]
    %v99 = vld [vmem:[#allocation2 + $0x40] sm:$0xff]
    %v100 = vld [vmem:[#allocation2 + $0x48] sm:$0xff]
    %v101 = vld [vmem:[#allocation2 + $0x50] sm:$0xff]
    %v102 = vld [vmem:[#allocation2 + $0x58] sm:$0xff]
    %v103 = vld [vmem:[#allocation2 + $0x60] sm:$0xff]
    %v104 = vld [vmem:[#allocation2 + $0x68] sm:$0xff]
    %v105 = vld [vmem:[#allocation2 + $0x70] sm:$0xff]
    %v106 = vld [vmem:[#allocation2 + $0x78] sm:$0xff]
    %v107 = vld [vmem:[#allocation2 + $0x80] sm:$0xff]
    %v108 = vld [vmem:[#allocation2 + $0x88] sm:$0xff]
    %v109 = vld [vmem:[#allocation2 + $0x90] sm:$0xff]
    %v110 = vld [vmem:[#allocation2 + $0x98] sm:$0xff]
    %v111 = vld [vmem:[#allocation2 + $0xa0] sm:$0xff]
    %v112 = vld [vmem:[#allocation2 + $0xa8] sm:$0xff]
    %v113 = vld [vmem:[#allocation2 + $0xb0] sm:$0xff]
    %v114 = vld [vmem:[#allocation2 + $0xb8] sm:$0xff]
    %v115 = vld [vmem:[#allocation2 + $0xc0] sm:$0xff]
    %v116 = vld [vmem:[#allocation2 + $0xc8] sm:$0xff]
    %v117 = vld [vmem:[#allocation2 + $0xd0] sm:$0xff]
    %v118 = vld [vmem:[#allocation2 + $0xd8] sm:$0xff]
    %v119 = vld [vmem:[#allocation2 + $0xe0] sm:$0xff]
    %v120 = vld [vmem:[#allocation2 + $0xe8] sm:$0xff]
    %v121 = vld [vmem:[#allocation2 + $0xf0] sm:$0xff]
    %v122 = vld [vmem:[#allocation2 + $0xf8] sm:$0xff]
    %v123 = vld [vmem:[#allocation3] sm:$0xf]
    %v124 = vld [vmem:[#allocation3 + $0x4] sm:$0xf]
    %v125 = vld [vmem:[#allocation3 + $0x8] sm:$0xf]
    %v126 = vld [vmem:[#allocation3 + $0xc] sm:$0xf]
    %v127 = vld [vmem:[#allocation3 + $0x10] sm:$0xf]
    %v128 = vld [vmem:[#allocation3 + $0x14] sm:$0xf]
    %v129 = vld [vmem:[#allocation3 + $0x18] sm:$0xf]
    %v130 = vld [vmem:[#allocation3 + $0x1c] sm:$0xf]
    %v131 = vld [vmem:[#allocation3 + $0x20] sm:$0xf]
    %v132 = vld [vmem:[#allocation3 + $0x24] sm:$0xf]
    %v133 = vld [vmem:[#allocation3 + $0x28] sm:$0xf]
    %v134 = vld [vmem:[#allocation3 + $0x2c] sm:$0xf]
    %v135 = vld [vmem:[#allocation3 + $0x30] sm:$0xf]
    %v136 = vld [vmem:[#allocation3 + $0x34] sm:$0xf]
    %v137 = vld [vmem:[#allocation3 + $0x38] sm:$0xf]
    %v138 = vld [vmem:[#allocation3 + $0x3c] sm:$0xf]
    %v139 = vld [vmem:[#allocation3 + $0x40] sm:$0xf]
    %v140 = vld [vmem:[#allocation3 + $0x44] sm:$0xf]
    %v141 = vld [vmem:[#allocation3 + $0x48] sm:$0xf]
    %v142 = vld [vmem:[#allocation3 + $0x4c] sm:$0xf]
    %v143 = vld [vmem:[#allocation3 + $0x50] sm:$0xf]
    %v144 = vld [vmem:[#allocation3 + $0x54] sm:$0xf]
    %v145 = vld [vmem:[#allocation3 + $0x58] sm:$0xf]
    %v146 = vld [vmem:[#allocation3 + $0x5c] sm:$0xf]
    %v147 = vld [vmem:[#allocation3 + $0x60] sm:$0xf]
    %v148 = vld [vmem:[#allocation3 + $0x64] sm:$0xf]
    %v149 = vld [vmem:[#allocation3 + $0x68] sm:$0xf]
    %v150 = vld [vmem:[#allocation3 + $0x6c] sm:$0xf]
    %v151 = vld [vmem:[#allocation3 + $0x70] sm:$0xf]
    %v152 = vld [vmem:[#allocation3 + $0x74] sm:$0xf]
    %v153 = vld [vmem:[#allocation3 + $0x78] sm:$0xf]
    %v154 = vld [vmem:[#allocation3 + $0x7c] sm:$0xf]
    %v155 = vld [vmem:[#allocation6] sm:$0xf]
    %v156 = vld [vmem:[#allocation6 + $0x4] sm:$0xf]
    %v157 = vld [vmem:[#allocation6 + $0x8] sm:$0xf]
    %v158 = vld [vmem:[#allocation6 + $0xc] sm:$0xf]
    %v159 = vld [vmem:[#allocation6 + $0x10] sm:$0xf]
    %v160 = vld [vmem:[#allocation6 + $0x14] sm:$0xf]
    %v161 = vld [vmem:[#allocation6 + $0x18] sm:$0xf]
    %v162 = vld [vmem:[#allocation6 + $0x1c] sm:$0xf]
    %v163 = vld [vmem:[#allocation6 + $0x20] sm:$0xf]
    %v164 = vld [vmem:[#allocation6 + $0x24] sm:$0xf]
    %v165 = vld [vmem:[#allocation6 + $0x28] sm:$0xf]
    %v166 = vld [vmem:[#allocation6 + $0x2c] sm:$0xf]
    %v167 = vld [vmem:[#allocation6 + $0x30] sm:$0xf]
    %v168 = vld [vmem:[#allocation6 + $0x34] sm:$0xf]
    %v169 = vld [vmem:[#allocation6 + $0x38] sm:$0xf]
    %v170 = vld [vmem:[#allocation6 + $0x3c] sm:$0xf]
    %v203 = vunpack.c.l.b16 %v123
    %v204 = vunpack.c.l.b16 %v124
    %v205 = vunpack.c.l.b16 %v125
    %v206 = vunpack.c.l.b16 %v126
    %v207 = vunpack.c.l.b16 %v127
    %v208 = vunpack.c.l.b16 %v128
    %v209 = vunpack.c.l.b16 %v129
    %v210 = vunpack.c.l.b16 %v130
    %v211 = vunpack.c.l.b16 %v131
    %v212 = vunpack.c.l.b16 %v132
    %v213 = vunpack.c.l.b16 %v133
    %v214 = vunpack.c.l.b16 %v134
    %v215 = vunpack.c.l.b16 %v135
    %v216 = vunpack.c.l.b16 %v136
    %v217 = vunpack.c.l.b16 %v137
    %v218 = vunpack.c.l.b16 %v138
    %v219 = vunpack.c.l.b16 %v139
    %v220 = vunpack.c.l.b16 %v140
    %v221 = vunpack.c.l.b16 %v141
    %v222 = vunpack.c.l.b16 %v142
    %v223 = vunpack.c.l.b16 %v143
    %v224 = vunpack.c.l.b16 %v144
    %v225 = vunpack.c.l.b16 %v145
    %v226 = vunpack.c.l.b16 %v146
    %v227 = vunpack.c.l.b16 %v147
    %v228 = vunpack.c.l.b16 %v148
    %v229 = vunpack.c.l.b16 %v149
    %v230 = vunpack.c.l.b16 %v150
    %v231 = vunpack.c.l.b16 %v151
    %v232 = vunpack.c.l.b16 %v152
    %v233 = vunpack.c.l.b16 %v153
    %v234 = vunpack.c.l.b16 %v154
    %v235 = vpack.c.b16 %v204, %v203
    %v236 = vpack.c.b16 %v206, %v205
    %v237 = vpack.c.b16 %v208, %v207
    %v238 = vpack.c.b16 %v210, %v209
    %v239 = vpack.c.b16 %v212, %v211
    %v240 = vpack.c.b16 %v214, %v213
    %v241 = vpack.c.b16 %v216, %v215
    %v242 = vpack.c.b16 %v218, %v217
    %v243 = vpack.c.b16 %v220, %v219
    %v244 = vpack.c.b16 %v222, %v221
    %v245 = vpack.c.b16 %v224, %v223
    %v246 = vpack.c.b16 %v226, %v225
    %v247 = vpack.c.b16 %v228, %v227
    %v248 = vpack.c.b16 %v230, %v229
    %v249 = vpack.c.b16 %v232, %v231
    %v250 = vpack.c.b16 %v234, %v233
    %v283 = vunpack.c.l.b16 %v155
    %v284 = vunpack.c.l.b16 %v156
    %v285 = vunpack.c.l.b16 %v157
    %v286 = vunpack.c.l.b16 %v158
    %v287 = vunpack.c.l.b16 %v159
    %v288 = vunpack.c.l.b16 %v160
    %v289 = vunpack.c.l.b16 %v161
    %v290 = vunpack.c.l.b16 %v162
    %v291 = vunpack.c.l.b16 %v163
    %v292 = vunpack.c.l.b16 %v164
    %v293 = vunpack.c.l.b16 %v165
    %v294 = vunpack.c.l.b16 %v166
    %v295 = vunpack.c.l.b16 %v167
    %v296 = vunpack.c.l.b16 %v168
    %v297 = vunpack.c.l.b16 %v169
    %v298 = vunpack.c.l.b16 %v170
    %v299 = vpack.c.b16 %v284, %v283
    %v300 = vpack.c.b16 %v286, %v285
    %v301 = vpack.c.b16 %v288, %v287
    %v302 = vpack.c.b16 %v290, %v289
    %v303 = vpack.c.b16 %v292, %v291
    %v304 = vpack.c.b16 %v294, %v293
    %v305 = vpack.c.b16 %v296, %v295
    %v306 = vpack.c.b16 %v298, %v297
    %315 = vmatprep.subr.bf16.mxu0 0
    %316 = vmatpush1.bf16.msra.mxu0 %v299
    %317 = vmatprep.subr.bf16.mxu0 0
    %318 = vmatpush1.bf16.msra.mxu0 %v300
    %319 = vmatprep.subr.bf16.mxu0 0
    %320 = vmatpush1.bf16.msra.mxu0 %v301
    %321 = vmatprep.subr.bf16.mxu0 0
    %322 = vmatpush1.bf16.msra.mxu0 %v302
    %323 = vmatprep.subr.bf16.mxu0 0
    %324 = vmatpush1.bf16.msra.mxu0 %v303
    %325 = vmatprep.subr.bf16.mxu0 0
    %326 = vmatpush1.bf16.msra.mxu0 %v304
    %327 = vmatprep.subr.bf16.mxu0 0
    %328 = vmatpush1.bf16.msra.mxu0 %v305
    %329 = vmatprep.subr.bf16.mxu0 0
    %330 = vmatpush1.bf16.msra.mxu0 %v306
    %331 = vmatprep.subr.bf16.mxu0 0
    %332 = vmatpush1.bf16.msra.mxu0 0
    %333 = vmatprep.subr.bf16.mxu0 0
    %334 = vmatpush1.bf16.msra.mxu0 0
    %335 = vmatprep.subr.bf16.mxu0 0
    %336 = vmatpush1.bf16.msra.mxu0 0
    %337 = vmatprep.subr.bf16.mxu0 0
    %338 = vmatpush1.bf16.msra.mxu0 0
    %339 = vmatprep.subr.bf16.mxu0 0
    %340 = vmatpush1.bf16.msra.mxu0 0
    %341 = vmatprep.subr.bf16.mxu0 0
    %342 = vmatpush1.bf16.msra.mxu0 0
    %343 = vmatprep.subr.bf16.mxu0 0
    %344 = vmatpush1.bf16.msra.mxu0 0
    %345 = vmatprep.subr.bf16.mxu0 0
    %346 = vmatpush1.bf16.msra.mxu0 0
    %347 = vmatprep.mubr.bf16.mxu0 0
    %348 = vmatmul.mubr.bf16.gmra.mrb[0].mxu0 %v235
    %v349 = vpop.f32.mrb[0].mxu0
    %v350 = vadd.f32 0.0, %v349
    %v351 = vpop.f32.mrb[0].mxu0
    %v352 = vpop.f32.mrb[0].mxu0
    %v353 = vadd.f32 0.0, %v352
    %v354 = vpop.f32.mrb[0].mxu0
    %355 = vmatprep.mubr.bf16.mxu0 0
    %356 = vmatmul.mubr.bf16.gmra.mrb[0].mxu0 %v236
    %v357 = vpop.f32.mrb[0].mxu0
    %v358 = vadd.f32 0.0, %v357
    %v359 = vpop.f32.mrb[0].mxu0
    %v360 = vpop.f32.mrb[0].mxu0
    %v361 = vadd.f32 0.0, %v360
    %v362 = vpop.f32.mrb[0].mxu0
    %363 = vmatprep.mubr.bf16.mxu0 0
    %364 = vmatmul.mubr.bf16.gmra.mrb[0].mxu0 %v237
    %v365 = vpop.f32.mrb[0].mxu0
    %v366 = vadd.f32 0.0, %v365
    %v367 = vpop.f32.mrb[0].mxu0
    %v368 = vpop.f32.mrb[0].mxu0
    %v369 = vadd.f32 0.0, %v368
    %v370 = vpop.f32.mrb[0].mxu0
    %371 = vmatprep.mubr.bf16.mxu0 0
    %372 = vmatmul.mubr.bf16.gmra.mrb[0].mxu0 %v238
    %v373 = vpop.f32.mrb[0].mxu0
    %v374 = vadd.f32 0.0, %v373
    %v375 = vpop.f32.mrb[0].mxu0
    %v376 = vpop.f32.mrb[0].mxu0
    %v377 = vadd.f32 0.0, %v376
    %v378 = vpop.f32.mrb[0].mxu0
    %379 = vmatprep.mubr.bf16.mxu0 0
    %380 = vmatmul.mubr.bf16.gmra.mrb[0].mxu0 %v239
    %v381 = vpop.f32.mrb[0].mxu0
    %v382 = vadd.f32 0.0, %v381
    %v383 = vpop.f32.mrb[0].mxu0
    %v384 = vpop.f32.mrb[0].mxu0
    %v385 = vadd.f32 0.0, %v384
    %v386 = vpop.f32.mrb[0].mxu0
    %387 = vmatprep.mubr.bf16.mxu0 0
    %388 = vmatmul.mubr.bf16.gmra.mrb[0].mxu0 %v240
    %v389 = vpop.f32.mrb[0].mxu0
    %v390 = vadd.f32 0.0, %v389
    %v391 = vpop.f32.mrb[0].mxu0
    %v392 = vpop.f32.mrb[0].mxu0
    %v393 = vadd.f32 0.0, %v392
    %v394 = vpop.f32.mrb[0].mxu0
    %395 = vmatprep.mubr.bf16.mxu0 0
    %396 = vmatmul.mubr.bf16.gmra.mrb[0].mxu0 %v241
    %v397 = vpop.f32.mrb[0].mxu0
    %v398 = vadd.f32 0.0, %v397
    %v399 = vpop.f32.mrb[0].mxu0
    %v400 = vpop.f32.mrb[0].mxu0
    %v401 = vadd.f32 0.0, %v400
    %v402 = vpop.f32.mrb[0].mxu0
    %403 = vmatprep.mubr.bf16.mxu0 0
    %404 = vmatmul.mubr.bf16.gmra.mrb[0].mxu0 %v242
    %v405 = vpop.f32.mrb[0].mxu0
    %v406 = vadd.f32 0.0, %v405
    %v407 = vpop.f32.mrb[0].mxu0
    %v408 = vpop.f32.mrb[0].mxu0
    %v409 = vadd.f32 0.0, %v408
    %v410 = vpop.f32.mrb[0].mxu0
    %411 = vmatprep.mubr.bf16.mxu0 0
    %412 = vmatmul.mubr.bf16.gmra.mrb[0].mxu0 %v243
    %v413 = vpop.f32.mrb[0].mxu0
    %v414 = vadd.f32 0.0, %v413
    %v415 = vpop.f32.mrb[0].mxu0
    %v416 = vpop.f32.mrb[0].mxu0
    %v417 = vadd.f32 0.0, %v416
    %v418 = vpop.f32.mrb[0].mxu0
    %419 = vmatprep.mubr.bf16.mxu0 0
    %420 = vmatmul.mubr.bf16.gmra.mrb[0].mxu0 %v244
    %v421 = vpop.f32.mrb[0].mxu0
    %v422 = vadd.f32 0.0, %v421
    %v423 = vpop.f32.mrb[0].mxu0
    %v424 = vpop.f32.mrb[0].mxu0
    %v425 = vadd.f32 0.0, %v424
    %v426 = vpop.f32.mrb[0].mxu0
    %427 = vmatprep.mubr.bf16.mxu0 0
    %428 = vmatmul.mubr.bf16.gmra.mrb[0].mxu0 %v245
    %v429 = vpop.f32.mrb[0].mxu0
    %v430 = vadd.f32 0.0, %v429
    %v431 = vpop.f32.mrb[0].mxu0
    %v432 = vpop.f32.mrb[0].mxu0
    %v433 = vadd.f32 0.0, %v432
    %v434 = vpop.f32.mrb[0].mxu0
    %435 = vmatprep.mubr.bf16.mxu0 0
    %436 = vmatmul.mubr.bf16.gmra.mrb[0].mxu0 %v246
    %v437 = vpop.f32.mrb[0].mxu0
    %v438 = vadd.f32 0.0, %v437
    %v439 = vpop.f32.mrb[0].mxu0
    %v440 = vpop.f32.mrb[0].mxu0
    %v441 = vadd.f32 0.0, %v440
    %v442 = vpop.f32.mrb[0].mxu0
    %443 = vmatprep.mubr.bf16.mxu0 0
    %444 = vmatmul.mubr.bf16.gmra.mrb[0].mxu0 %v247
    %v445 = vpop.f32.mrb[0].mxu0
    %v446 = vadd.f32 0.0, %v445
    %v447 = vpop.f32.mrb[0].mxu0
    %v448 = vpop.f32.mrb[0].mxu0
    %v449 = vadd.f32 0.0, %v448
    %v450 = vpop.f32.mrb[0].mxu0
    %451 = vmatprep.mubr.bf16.mxu0 0
    %452 = vmatmul.mubr.bf16.gmra.mrb[0].mxu0 %v248
    %v453 = vpop.f32.mrb[0].mxu0
    %v454 = vadd.f32 0.0, %v453
    %v455 = vpop.f32.mrb[0].mxu0
    %v456 = vpop.f32.mrb[0].mxu0
    %v457 = vadd.f32 0.0, %v456
    %v458 = vpop.f32.mrb[0].mxu0
    %459 = vmatprep.mubr.bf16.mxu0 0
    %460 = vmatmul.mubr.bf16.gmra.mrb[0].mxu0 %v249
    %v461 = vpop.f32.mrb[0].mxu0
    %v462 = vadd.f32 0.0, %v461
    %v463 = vpop.f32.mrb[0].mxu0
    %v464 = vpop.f32.mrb[0].mxu0
    %v465 = vadd.f32 0.0, %v464
    %v466 = vpop.f32.mrb[0].mxu0
    %467 = vmatprep.mubr.bf16.mxu0 0
    %468 = vmatmul.mubr.bf16.gmra.mrb[0].mxu0 %v250
    %v469 = vpop.f32.mrb[0].mxu0
    %v470 = vadd.f32 0.0, %v469
    %v471 = vpop.f32.mrb[0].mxu0
    %v472 = vpop.f32.mrb[0].mxu0
    %v473 = vadd.f32 0.0, %v472
    %v474 = vpop.f32.mrb[0].mxu0
    %475 = vdwg.mxu0
    %v476 = vadd.f32 %v91, %v350
    %v477 = vadd.f32 %v92, %v353
    %v478 = vadd.f32 %v93, %v358
    %v479 = vadd.f32 %v94, %v361
    %v480 = vadd.f32 %v95, %v366
    %v481 = vadd.f32 %v96, %v369
    %v482 = vadd.f32 %v97, %v374
    %v483 = vadd.f32 %v98, %v377
    %v484 = vadd.f32 %v99, %v382
    %v485 = vadd.f32 %v100, %v385
    %v486 = vadd.f32 %v101, %v390
    %v487 = vadd.f32 %v102, %v393
    %v488 = vadd.f32 %v103, %v398
    %v489 = vadd.f32 %v104, %v401
    %v490 = vadd.f32 %v105, %v406
    %v491 = vadd.f32 %v106, %v409
    %v492 = vadd.f32 %v107, %v414
    %v493 = vadd.f32 %v108, %v417
    %v494 = vadd.f32 %v109, %v422
    %v495 = vadd.f32 %v110, %v425
    %v496 = vadd.f32 %v111, %v430
    %v497 = vadd.f32 %v112, %v433
    %v498 = vadd.f32 %v113, %v438
    %v499 = vadd.f32 %v114, %v441
    %v500 = vadd.f32 %v115, %v446
    %v501 = vadd.f32 %v116, %v449
    %v502 = vadd.f32 %v117, %v454
    %v503 = vadd.f32 %v118, %v457
    %v504 = vadd.f32 %v119, %v462
    %v505 = vadd.f32 %v120, %v465
    %v506 = vadd.f32 %v121, %v470
    %v507 = vadd.f32 %v122, %v473
    %508 = vst [vmem:[#allocation2] sm:$0xff] %v476
    %509 = vst [vmem:[#allocation2 + $0x8] sm:$0xff] %v477
    %510 = vst [vmem:[#allocation2 + $0x10] sm:$0xff] %v478
    %511 = vst [vmem:[#allocation2 + $0x18] sm:$0xff] %v479
    %512 = vst [vmem:[#allocation2 + $0x20] sm:$0xff] %v480
    %513 = vst [vmem:[#allocation2 + $0x28] sm:$0xff] %v481
    %514 = vst [vmem:[#allocation2 + $0x30] sm:$0xff] %v482
    %515 = vst [vmem:[#allocation2 + $0x38] sm:$0xff] %v483
    %516 = vst [vmem:[#allocation2 + $0x40] sm:$0xff] %v484
    %517 = vst [vmem:[#allocation2 + $0x48] sm:$0xff] %v485
    %518 = vst [vmem:[#allocation2 + $0x50] sm:$0xff] %v486
    %519 = vst [vmem:[#allocation2 + $0x58] sm:$0xff] %v487
    %520 = vst [vmem:[#allocation2 + $0x60] sm:$0xff] %v488
    %521 = vst [vmem:[#allocation2 + $0x68] sm:$0xff] %v489
    %522 = vst [vmem:[#allocation2 + $0x70] sm:$0xff] %v490
    %523 = vst [vmem:[#allocation2 + $0x78] sm:$0xff] %v491
    %524 = vst [vmem:[#allocation2 + $0x80] sm:$0xff] %v492
    %525 = vst [vmem:[#allocation2 + $0x88] sm:$0xff] %v493
    %526 = vst [vmem:[#allocation2 + $0x90] sm:$0xff] %v494
    %527 = vst [vmem:[#allocation2 + $0x98] sm:$0xff] %v495
    %528 = vst [vmem:[#allocation2 + $0xa0] sm:$0xff] %v496
    %529 = vst [vmem:[#allocation2 + $0xa8] sm:$0xff] %v497
    %530 = vst [vmem:[#allocation2 + $0xb0] sm:$0xff] %v498
    %531 = vst [vmem:[#allocation2 + $0xb8] sm:$0xff] %v499
    %532 = vst [vmem:[#allocation2 + $0xc0] sm:$0xff] %v500
    %533 = vst [vmem:[#allocation2 + $0xc8] sm:$0xff] %v501
    %534 = vst [vmem:[#allocation2 + $0xd0] sm:$0xff] %v502
    %535 = vst [vmem:[#allocation2 + $0xd8] sm:$0xff] %v503
    %536 = vst [vmem:[#allocation2 + $0xe0] sm:$0xff] %v504
    %537 = vst [vmem:[#allocation2 + $0xe8] sm:$0xff] %v505
    %538 = vst [vmem:[#allocation2 + $0xf0] sm:$0xff] %v506
    %539 = vst [vmem:[#allocation2 + $0xf8] sm:$0xff] %v507
    // Predicated region
    $region30: #{basic_convolution_block.1} parent=1 // pred_check
      %p540 = pneg %p55
    $region31: #{basic_convolution_block.1} parent=1 // pred_check_branch
      %542 = sbr.rel (%p540) target = $region33
    $region32: #{basic_convolution_block.1} parent=1 // pred_region
      %v543 = vld [vmem:[#allocation2] sm:$0xff]
      %v544 = vld [vmem:[#allocation2 + $0x8] sm:$0xff]
      %v545 = vld [vmem:[#allocation2 + $0x10] sm:$0xff]
      %v546 = vld [vmem:[#allocation2 + $0x18] sm:$0xff]
      %v547 = vld [vmem:[#allocation2 + $0x20] sm:$0xff]
      %v548 = vld [vmem:[#allocation2 + $0x28] sm:$0xff]
      %v549 = vld [vmem:[#allocation2 + $0x30] sm:$0xff]
      %v550 = vld [vmem:[#allocation2 + $0x38] sm:$0xff]
      %v551 = vld [vmem:[#allocation2 + $0x40] sm:$0xff]
      %v552 = vld [vmem:[#allocation2 + $0x48] sm:$0xff]
      %v553 = vld [vmem:[#allocation2 + $0x50] sm:$0xff]
      %v554 = vld [vmem:[#allocation2 + $0x58] sm:$0xff]
      %v555 = vld [vmem:[#allocation2 + $0x60] sm:$0xff]
      %v556 = vld [vmem:[#allocation2 + $0x68] sm:$0xff]
      %v557 = vld [vmem:[#allocation2 + $0x70] sm:$0xff]
      %v558 = vld [vmem:[#allocation2 + $0x78] sm:$0xff]
      %v559 = vld [vmem:[#allocation2 + $0x80] sm:$0xff]
      %v560 = vld [vmem:[#allocation2 + $0x88] sm:$0xff]
      %v561 = vld [vmem:[#allocation2 + $0x90] sm:$0xff]
      %v562 = vld [vmem:[#allocation2 + $0x98] sm:$0xff]
      %v563 = vld [vmem:[#allocation2 + $0xa0] sm:$0xff]
      %v564 = vld [vmem:[#allocation2 + $0xa8] sm:$0xff]
      %v565 = vld [vmem:[#allocation2 + $0xb0] sm:$0xff]
      %v566 = vld [vmem:[#allocation2 + $0xb8] sm:$0xff]
      %v567 = vld [vmem:[#allocation2 + $0xc0] sm:$0xff]
      %v568 = vld [vmem:[#allocation2 + $0xc8] sm:$0xff]
      %v569 = vld [vmem:[#allocation2 + $0xd0] sm:$0xff]
      %v570 = vld [vmem:[#allocation2 + $0xd8] sm:$0xff]
      %v571 = vld [vmem:[#allocation2 + $0xe0] sm:$0xff]
      %v572 = vld [vmem:[#allocation2 + $0xe8] sm:$0xff]
      %v573 = vld [vmem:[#allocation2 + $0xf0] sm:$0xff]
      %v574 = vld [vmem:[#allocation2 + $0xf8] sm:$0xff]
      %v575 = vld [vmem:[#allocation8] sm:$0x1]
      %v577 = vlaneseq
      %v578 = vshrl.u32 %v577, 7
      %v579 = vsub.s32 0, %v578
      %v580 = vrot.slane %v575, %v579
      %v582 = vadd.f32 %v543, %v580
      %v583 = vadd.f32 %v544, %v580
      %v584 = vadd.f32 %v545, %v580
      %v585 = vadd.f32 %v546, %v580
      %v586 = vadd.f32 %v547, %v580
      %v587 = vadd.f32 %v548, %v580
      %v588 = vadd.f32 %v549, %v580
      %v589 = vadd.f32 %v550, %v580
      %v590 = vadd.f32 %v551, %v580
      %v591 = vadd.f32 %v552, %v580
      %v592 = vadd.f32 %v553, %v580
      %v593 = vadd.f32 %v554, %v580
      %v594 = vadd.f32 %v555, %v580
      %v595 = vadd.f32 %v556, %v580
      %v596 = vadd.f32 %v557, %v580
      %v597 = vadd.f32 %v558, %v580
      %v598 = vadd.f32 %v559, %v580
      %v599 = vadd.f32 %v560, %v580
      %v600 = vadd.f32 %v561, %v580
      %v601 = vadd.f32 %v562, %v580
      %v602 = vadd.f32 %v563, %v580
      %v603 = vadd.f32 %v564, %v580
      %v604 = vadd.f32 %v565, %v580
      %v605 = vadd.f32 %v566, %v580
      %v606 = vadd.f32 %v567, %v580
      %v607 = vadd.f32 %v568, %v580
      %v608 = vadd.f32 %v569, %v580
      %v609 = vadd.f32 %v570, %v580
      %v610 = vadd.f32 %v571, %v580
      %v611 = vadd.f32 %v572, %v580
      %v612 = vadd.f32 %v573, %v580
      %v613 = vadd.f32 %v574, %v580
      %v614 = vmax.f32 %v582, 0.0
      %v615 = vmax.f32 %v583, 0.0
      %v616 = vmax.f32 %v584, 0.0
      %v617 = vmax.f32 %v585, 0.0
      %v618 = vmax.f32 %v586, 0.0
      %v619 = vmax.f32 %v587, 0.0
      %v620 = vmax.f32 %v588, 0.0
      %v621 = vmax.f32 %v589, 0.0
      %v622 = vmax.f32 %v590, 0.0
      %v623 = vmax.f32 %v591, 0.0
      %v624 = vmax.f32 %v592, 0.0
      %v625 = vmax.f32 %v593, 0.0
      %v626 = vmax.f32 %v594, 0.0
      %v627 = vmax.f32 %v595, 0.0
      %v628 = vmax.f32 %v596, 0.0
      %v629 = vmax.f32 %v597, 0.0
      %v630 = vmax.f32 %v598, 0.0
      %v631 = vmax.f32 %v599, 0.0
      %v632 = vmax.f32 %v600, 0.0
      %v633 = vmax.f32 %v601, 0.0
      %v634 = vmax.f32 %v602, 0.0
      %v635 = vmax.f32 %v603, 0.0
      %v636 = vmax.f32 %v604, 0.0
      %v637 = vmax.f32 %v605, 0.0
      %v638 = vmax.f32 %v606, 0.0
      %v639 = vmax.f32 %v607, 0.0
      %v640 = vmax.f32 %v608, 0.0
      %v641 = vmax.f32 %v609, 0.0
      %v642 = vmax.f32 %v610, 0.0
      %v643 = vmax.f32 %v611, 0.0
      %v644 = vmax.f32 %v612, 0.0
      %v645 = vmax.f32 %v613, 0.0
      %646 = vst [vmem:[#allocation9] sm:$0xff] %v614
      %647 = vst [vmem:[#allocation9 + $0x8] sm:$0xff] %v615
      %648 = vst [vmem:[#allocation9 + $0x10] sm:$0xff] %v616
      %649 = vst [vmem:[#allocation9 + $0x18] sm:$0xff] %v617
      %650 = vst [vmem:[#allocation9 + $0x20] sm:$0xff] %v618
      %651 = vst [vmem:[#allocation9 + $0x28] sm:$0xff] %v619
      %652 = vst [vmem:[#allocation9 + $0x30] sm:$0xff] %v620
      %653 = vst [vmem:[#allocation9 + $0x38] sm:$0xff] %v621
      %654 = vst [vmem:[#allocation9 + $0x40] sm:$0xff] %v622
      %655 = vst [vmem:[#allocation9 + $0x48] sm:$0xff] %v623
      %656 = vst [vmem:[#allocation9 + $0x50] sm:$0xff] %v624
      %657 = vst [vmem:[#allocation9 + $0x58] sm:$0xff] %v625
      %658 = vst [vmem:[#allocation9 + $0x60] sm:$0xff] %v626
      %659 = vst [vmem:[#allocation9 + $0x68] sm:$0xff] %v627
      %660 = vst [vmem:[#allocation9 + $0x70] sm:$0xff] %v628
      %661 = vst [vmem:[#allocation9 + $0x78] sm:$0xff] %v629
      %662 = vst [vmem:[#allocation9 + $0x80] sm:$0xff] %v630
      %663 = vst [vmem:[#allocation9 + $0x88] sm:$0xff] %v631
      %664 = vst [vmem:[#allocation9 + $0x90] sm:$0xff] %v632
      %665 = vst [vmem:[#allocation9 + $0x98] sm:$0xff] %v633
      %666 = vst [vmem:[#allocation9 + $0xa0] sm:$0xff] %v634
      %667 = vst [vmem:[#allocation9 + $0xa8] sm:$0xff] %v635
      %668 = vst [vmem:[#allocation9 + $0xb0] sm:$0xff] %v636
      %669 = vst [vmem:[#allocation9 + $0xb8] sm:$0xff] %v637
      %670 = vst [vmem:[#allocation9 + $0xc0] sm:$0xff] %v638
      %671 = vst [vmem:[#allocation9 + $0xc8] sm:$0xff] %v639
      %672 = vst [vmem:[#allocation9 + $0xd0] sm:$0xff] %v640
      %673 = vst [vmem:[#allocation9 + $0xd8] sm:$0xff] %v641
      %674 = vst [vmem:[#allocation9 + $0xe0] sm:$0xff] %v642
      %675 = vst [vmem:[#allocation9 + $0xe8] sm:$0xff] %v643
      %676 = vst [vmem:[#allocation9 + $0xf0] sm:$0xff] %v644
      %677 = vst [vmem:[#allocation9 + $0xf8] sm:$0xff] %v645
    $region33: #{basic_convolution_block.1} parent=1 // pred_fallthru
      _
    // Predicated region
    $region34: #{basic_convolution_block.1} parent=1 // pred_check
      _
    $region35: #{basic_convolution_block.1} parent=1 // pred_check_branch
      %679 = sbr.rel (0) target = $region37
    $region36: #{basic_convolution_block.1} parent=1 // pred_region
      %s681 = ssub.s32 4096, 4096
      %682 = vsyncadd [#allocation5], %s681
      %s683 = sshll.u32 [#allocation9], 4
      %s684 = int_to_ptr.vmem [resolvable:$true] %s683
      %689 = dma.vmem_to_hbm [thread:$0]  %s684, 4096, %s3, [#allocation5], 128, 128, 8
    $region37: #{basic_convolution_block.1} parent=1 // pred_fallthru
      _
    // Predicated region
    $region38: #{basic_convolution_block.1} parent=1 // pred_check
      _
    $region39: #{basic_convolution_block.1} parent=1 // pred_check_branch
      %691 = sbr.rel (0) target = $region41
    $region40: #{basic_convolution_block.1} parent=1 // pred_region
      %692 = dma.done [#allocation5], 4096
    $region41: #{basic_convolution_block.1} parent=1 // pred_fallthru
      _
    %693 = vsyncpa [#allocation4], 1
    %694 = vsyncpa [#allocation7], 1
    %695 = vsyncpa [#allocation5], 1

</llo_original>
